<compile_context>
chip_gen: v7x
topology: tpu7x:2x2x1
jax: 0.10.0
libtpu: 0.0.40
codegen_flags: <defaults>
</compile_context>

<pallas_src>
import functools

import jax
import jax.numpy as jnp
from jax.experimental import pallas as pl
from jax.experimental.pallas import tpu as pltpu


def _cdiv(a, b):
    return (a + b - 1) // b


def _round_up(a, b):
    return _cdiv(a, b) * b


def _vmem_capacity_bytes():
    # Query the chip so the tile budget adapts to v5e/v6e (128 MiB) vs v7x (64 MiB).
    try:
        info = pltpu.get_tpu_info()
        cap = getattr(info, "vmem_capacity_bytes", None)
        if cap:
            return int(cap)
    except Exception:
        pass
    return 64 * 1024 * 1024  # conservative (v7x-sized) fallback


def _gap_kernel(x_ref, o_ref, acc_ref, *, inv_hw):
    # Grid: (row tiles [parallel], spatial chunks [reduction, last axis]).
    k = pl.program_id(1)

    @pl.when(k == 0)
    def _():
        acc_ref[...] = jnp.zeros_like(acc_ref)

    # Partial sum over this spatial chunk, accumulated in f32 (XLU/VPU reduce,
    # deliberately NOT routed through the MXU — this kernel is HBM-bound).
    acc_ref[...] += jnp.sum(x_ref[...].astype(jnp.float32), axis=-1, keepdims=True)

    @pl.when(k == pl.num_programs(1) - 1)
    def _():
        # Mean = sum * (1/HW): hoisted reciprocal constant, no per-lane divide.
        o_ref[...] = (acc_ref[...] * inv_hw).astype(o_ref.dtype)


def global_avg_pool2d(x):
    """Equivalent of F.avg_pool2d(x, kernel_size=x.shape[2:]) for NCHW input."""
    n, c, h, w = x.shape
    if not jnp.issubdtype(x.dtype, jnp.floating):
        # Match PyTorch avg_pool2d float semantics / avoid integer mean promotion.
        x = x.astype(jnp.float32)

    rows = n * c
    hw = h * w
    dtype_bytes = jnp.dtype(x.dtype).itemsize
    # Sublane alignment: 8 rows for f32, 16 for bf16, 32 for int8.
    row_align = 8 * max(1, 4 // dtype_bytes)

    # --- spatial (lane) tiling: lane-aligned (x128) chunks of bounded size -------
    MAX_HW_TILE = 16384  # elements per spatial chunk (<= 64 KiB per row in f32)
    hw_pad128 = _round_up(hw, 128)
    n_hw_blocks = _cdiv(hw_pad128, MAX_HW_TILE)
    hw_tile = _round_up(_cdiv(hw_pad128, n_hw_blocks), 128)
    hw_pad = n_hw_blocks * hw_tile
    # Note: for tiny feature maps (e.g. 7x7=49) lanes 49..127 are padding; a
    # lane-dense repack of several channels per 128-lane row would recover that
    # bandwidth, but pad-to-128 keeps correctness and is applied here.

    # --- row tiling: biggest tile fitting the (double-buffered) VMEM budget ------
    vmem_cap = _vmem_capacity_bytes()
    vmem_budget = vmem_cap // 2          # leave half of VMEM as headroom
    per_buffer = vmem_budget // 2        # input tile is double-buffered
    tile_rows_max = max(row_align, per_buffer // (hw_tile * dtype_bytes))
    tile_rows_max = min(2048, (tile_rows_max // row_align) * row_align)

    rows_pad0 = _round_up(rows, row_align)
    tile_rows = min(tile_rows_max, rows_pad0)
    tile_rows = max(row_align, (tile_rows // row_align) * row_align)
    # Prefer >= 2 row programs so v7x's two TensorCores both get work.
    if tile_rows >= rows_pad0 and rows_pad0 >= 2 * row_align:
        tile_rows = _round_up(_cdiv(rows_pad0, 2), row_align)
    rows_pad = _round_up(rows, tile_rows)

    # --- zero-pad to the tile grid (no single-full-array fallback) ---------------
    x2d = x.reshape(rows, hw)
    if rows_pad != rows or hw_pad != hw:
        x2d = jnp.pad(x2d, ((0, rows_pad - rows), (0, hw_pad - hw)))

    grid = (rows_pad // tile_rows, hw_pad // hw_tile)

    vmem_limit = min(
        vmem_cap,
        max(32 * 1024 * 1024,
            2 * tile_rows * hw_tile * dtype_bytes   # double-buffered input tile
            + 4 * tile_rows * 512                    # output buffers + f32 accumulator
            + (4 << 20)),                            # headroom
    )

    out2d = pl.pallas_call(
        functools.partial(_gap_kernel, inv_hw=1.0 / float(hw)),
        out_shape=jax.ShapeDtypeStruct((rows_pad, 1), x.dtype),
        grid_spec=pltpu.PrefetchScalarGridSpec(
            num_scalar_prefetch=0,
            grid=grid,
            in_specs=[pl.BlockSpec((tile_rows, hw_tile), lambda i, k: (i, k))],
            out_specs=pl.BlockSpec((tile_rows, 1), lambda i, k: (i, 0)),
            scratch_shapes=[pltpu.VMEM((tile_rows, 1), jnp.float32)],
        ),
        compiler_params=pltpu.CompilerParams(
            dimension_semantics=("parallel", "arbitrary"),
            vmem_limit_bytes=int(vmem_limit),
        ),
    )(x2d)

    return out2d[:rows].reshape(n, c, 1, 1)


if __name__ == "__main__":
    key = jax.random.PRNGKey(0)

    # Toy shape from the module spec.
    x = jax.random.normal(key, (2, 4, 16, 16), dtype=jnp.float32)
    out = global_avg_pool2d(x)
    jax.block_until_ready(out)
    ref = jnp.mean(x, axis=(2, 3), keepdims=True)
    assert out.shape == (2, 4, 1, 1), out.shape
    assert jnp.allclose(out, ref, atol=1e-5, rtol=1e-5)

    # Non-aligned shape exercises the padded-tile path (rows=6, hw=49).
    x2 = jax.random.normal(jax.random.PRNGKey(1), (2, 3, 7, 7), dtype=jnp.float32)
    out2 = global_avg_pool2d(x2)
    jax.block_until_ready(out2)
    ref2 = jnp.mean(x2, axis=(2, 3), keepdims=True)
    assert out2.shape == (2, 3, 1, 1), out2.shape
    assert jnp.allclose(out2, ref2, atol=1e-5, rtol=1e-5)

    print("KERNEL_OK")
</pallas_src>

<mosaic_0001>
module attributes {stable_mosaic.version = 11 : i64} {
  func.func @_gap_kernel(%arg0: i32, %arg1: i32, %arg2: memref<8x256xf32, #tpu.memory_space<vmem>>, %arg3: memref<8x1xf32, #tpu.memory_space<vmem>>, %arg4: memref<8x1xf32, #tpu.memory_space<vmem>>) attributes {dimension_semantics = [#tpu.dimension_semantics<parallel>, #tpu.dimension_semantics<arbitrary>], iteration_bounds = array<i64: 1, 1>, scalar_prefetch = 0 : i64, scratch_operands = 1 : i64, tpu.core_type = #tpu.core_type<tc>, window_params = [{transform_indices = @transform_0, window_bounds = array<i64: 8, 256>}, {transform_indices = @transform_1, window_bounds = array<i64: 8, 1>}]} {
    %c0_i32 = arith.constant 0 : i32
    %0 = arith.cmpi eq, %arg1, %c0_i32 : i32
    %1 = arith.extui %0 : i1 to i32
    %c0_i32_0 = arith.constant 0 : i32
    %2 = arith.cmpi ne, %1, %c0_i32_0 : i32
    scf.if %2 {
      %cst_8 = arith.constant 0.000000e+00 : f32
      %12 = vector.broadcast %cst_8 : f32 to vector<8x1xf32>
      %c0_9 = arith.constant 0 : index
      %c0_10 = arith.constant 0 : index
      %13 = vector.load %arg4[%c0_9, %c0_10] : memref<8x1xf32, #tpu.memory_space<vmem>>, vector<8x1xf32>
      tpu.vector_store %arg4[%c0_9, %c0_10], %12 {strides = array<i32>} : memref<8x1xf32, #tpu.memory_space<vmem>>, vector<8x1xf32>,
    } else {
    }
    %c0 = arith.constant 0 : index
    %c0_1 = arith.constant 0 : index
    %3 = vector.load %arg4[%c0, %c0_1] : memref<8x1xf32, #tpu.memory_space<vmem>>, vector<8x1xf32>
    %c0_2 = arith.constant 0 : index
    %c0_3 = arith.constant 0 : index
    %4 = vector.load %arg2[%c0_2, %c0_3] : memref<8x256xf32, #tpu.memory_space<vmem>>, vector<8x256xf32>
    %cst = arith.constant dense<0.000000e+00> : vector<8xf32>
    %5 = vector.multi_reduction <add>, %4, %cst [1] : vector<8x256xf32> to vector<8xf32>
    %6 = vector.shape_cast %5 : vector<8xf32> to vector<8x1xf32>
    %7 = arith.addf %3, %6 : vector<8x1xf32>
    %c0_4 = arith.constant 0 : index
    %c0_5 = arith.constant 0 : index
    %8 = vector.load %arg4[%c0_4, %c0_5] : memref<8x1xf32, #tpu.memory_space<vmem>>, vector<8x1xf32>
    tpu.vector_store %arg4[%c0_4, %c0_5], %7 {strides = array<i32>} : memref<8x1xf32, #tpu.memory_space<vmem>>, vector<8x1xf32>,
    %c0_i32_6 = arith.constant 0 : i32
    %9 = arith.cmpi eq, %arg1, %c0_i32_6 : i32
    %10 = arith.extui %9 : i1 to i32
    %c0_i32_7 = arith.constant 0 : i32
    %11 = arith.cmpi ne, %10, %c0_i32_7 : i32
    scf.if %11 {
      %c0_8 = arith.constant 0 : index
      %c0_9 = arith.constant 0 : index
      %12 = vector.load %arg4[%c0_8, %c0_9] : memref<8x1xf32, #tpu.memory_space<vmem>>, vector<8x1xf32>
      %cst_10 = arith.constant 3.906250e-03 : f32
      %13 = vector.broadcast %cst_10 : f32 to vector<8x1xf32>
      %14 = arith.mulf %12, %13 : vector<8x1xf32>
      %c0_11 = arith.constant 0 : index
      %c0_12 = arith.constant 0 : index
      %15 = vector.load %arg3[%c0_11, %c0_12] : memref<8x1xf32, #tpu.memory_space<vmem>>, vector<8x1xf32>
      tpu.vector_store %arg3[%c0_11, %c0_12], %14 {strides = array<i32>} : memref<8x1xf32, #tpu.memory_space<vmem>>, vector<8x1xf32>,
    } else {
    }
    return
  }
  func.func @transform_0(%arg0: i32, %arg1: i32) -> (i32, i32) {
    %c0_i32 = arith.constant 0 : i32
    return %arg0, %arg1 : i32, i32
  }
  func.func @transform_1(%arg0: i32, %arg1: i32) -> (i32, i32) {
    %c0_i32 = arith.constant 0 : i32
    %c0_i32_0 = arith.constant 0 : i32
    return %arg0, %c0_i32 : i32, i32
  }
}

</mosaic_0001>

<llo_original>
// kernel: tpu_custom_call.1
$region0: #{tpu_custom_call.1}
  #allocation0 [shape = 'u32[]', space=smem, size = 0x4, offset = 0x4, fixed_abs, tag = 'smem constant byte address 0x4 - core index']
  #allocation1 [shape = 'u32[144,128]{1,0:T(1,128)}', space=vmem, size = 0x12000, scoped, tag = 'internal scratch']
  #allocation2 [shape = 'f32[8,1]{1,0:T(8,128)}', space=vmem, size = 0x1000, scoped, tag = 'scratch operand']
  %s0 = inlined_call_operand.hbm [shape: f32[8,256], index: 0, kind: input, shape index: {}]
  %s1 = inlined_call_operand.vmem [shape: f32[8,1], index: 1, kind: output, shape index: {}]
  %s2 = sld [smem:[#allocation0]]
  $region26: #{tpu_custom_call.1} parent=0
    _
  %s4 = ssub.s32 1, %s2
  %s5 = scalar_select 0, %s4, %s2
  $region1: #{tpu_custom_call.1} parent=0
    #allocation3 [shape = 'u8[8192]{0}', space=vmem, size = 0x2000, scoped, tag = 'input window, operand 0, single buffered']
    #allocation4 [shape = 's32[1]{0}', space=sflag, size = 0x4, scoped, tag = 'scoped memory for tpu_custom_call.1']
    %6 = vsyncpa [#allocation4], 0
    // Predicated region
    $region2: #{tpu_custom_call.1} parent=1 // pred_check
      _
    $region3: #{tpu_custom_call.1} parent=1 // pred_check_branch
      %8 = sbr.rel (0) target = $region5
    $region4: #{tpu_custom_call.1} parent=1 // pred_region
      %s10 = ssub.s32 256, 256
      %11 = vsyncadd [#allocation4], %s10
      %s13 = sshll.u32 [#allocation3], 4
      %s14 = int_to_ptr.vmem [resolvable:$true] %s13
      %16 = dma.hbm_to_vmem [thread:$0]  %s0, 256, %s14, [#allocation4]
    $region5: #{tpu_custom_call.1} parent=1 // pred_fallthru
      _
    // Predicated region
    $region6: #{tpu_custom_call.1} parent=1 // pred_check
      _
    $region7: #{tpu_custom_call.1} parent=1 // pred_check_branch
      %18 = sbr.rel (0) target = $region9
    $region8: #{tpu_custom_call.1} parent=1 // pred_region
      %19 = dma.done [#allocation4], 256
    $region9: #{tpu_custom_call.1} parent=1 // pred_fallthru
      _
    %p20 = scmp.eq.s32.totalorder 0, 0
    // Predicated region
    $region10: #{tpu_custom_call.1} parent=1 // pred_check
      %p21 = pneg %p20
    $region11: #{tpu_custom_call.1} parent=1 // pred_check_branch
      %23 = sbr.rel (%p21) target = $region13
    $region12: #{tpu_custom_call.1} parent=1 // pred_region
      %vm24 = vcmask 7168
      %25 = vst.msk [vmem:[#allocation2] sm:$0xff] %vm24, 0.0
    $region13: #{tpu_custom_call.1} parent=1 // pred_fallthru
      _
    %v26 = vld [vmem:[#allocation2] sm:$0xff]
    %v27 = vld [vmem:[#allocation3] sm:$0xff]
    %v28 = vld [vmem:[#allocation3 + $0x8] sm:$0xff]
    %v29 = vadd.f32 %v27, %v28
    %30 = vadd.xlane.f32.xlu0 %v29
    %v31 = vpop.xlane.xlu0 %30
    %v32 = vadd.f32 %v26, %v31
    %vm33 = vcmask 7168
    %34 = vst.msk [vmem:[#allocation2] sm:$0xff] %vm33, %v32
    // Predicated region
    $region14: #{tpu_custom_call.1} parent=1 // pred_check
      %p35 = pneg %p20
    $region15: #{tpu_custom_call.1} parent=1 // pred_check_branch
      %37 = sbr.rel (%p35) target = $region17
    $region16: #{tpu_custom_call.1} parent=1 // pred_region
      %v38 = vld [vmem:[#allocation2] sm:$0xff]
      %v39 = vmul.f32 %v38, 0.00390625
      %40 = vst.msk [vmem:[%s1] sm:$0xff] %vm33, %v39
    $region17: #{tpu_custom_call.1} parent=1 // pred_fallthru
      _
    // Predicated region
    $region18: #{tpu_custom_call.1} parent=1 // pred_check
      _
    $region19: #{tpu_custom_call.1} parent=1 // pred_check_branch
      %42 = sbr.rel (0) target = $region21
    $region20: #{tpu_custom_call.1} parent=1 // pred_region
      _
    $region21: #{tpu_custom_call.1} parent=1 // pred_fallthru
      _
    // Predicated region
    $region22: #{tpu_custom_call.1} parent=1 // pred_check
      _
    $region23: #{tpu_custom_call.1} parent=1 // pred_check_branch
      %44 = sbr.rel (0) target = $region25
    $region24: #{tpu_custom_call.1} parent=1 // pred_region
      _
    $region25: #{tpu_custom_call.1} parent=1 // pred_fallthru
      _
    %45 = vsyncpa [#allocation4], 1

</llo_original>
